<compile_context>
chip_gen: v7x
topology: tpu7x:2x2x1
jax: 0.10.0
libtpu: 0.0.40
codegen_flags: <defaults>
</compile_context>

<pallas_src>
import functools

import jax
import jax.numpy as jnp
from jax.experimental import pallas as pl
from jax.experimental.pallas import tpu as pltpu


def _round_up(a, b):
    return (a + b - 1) // b * b


def _ffn_kernel(x_ref, w1t_ref, b1_ref, w2t_ref, b2_ref, o_ref):
    # x_ref: (tm, Hp) row tile of the flattened (N*L, Hp) input.
    x = x_ref[...]

    # conv1 (kernel_size=1): x @ W1^T + b1   (MXU matmul, f32 accumulate)
    h = jnp.dot(x, w1t_ref[...], preferred_element_type=jnp.float32)
    h = jnp.maximum(h + b1_ref[...], 0.0)  # bias + ReLU in f32 on the VPU

    # conv2 (kernel_size=1): relu(h) @ W2^T + b2  (feed MXU in the weight dtype)
    y = jnp.dot(h.astype(w2t_ref.dtype), w2t_ref[...],
                preferred_element_type=jnp.float32)

    # bias + residual in f32, single cast at the store.
    o_ref[...] = (y + b2_ref[...] + x).astype(o_ref.dtype)


@functools.partial(jax.jit, static_argnames=("tm", "single_buffer_weights"))
def _ffn_forward_impl(inputs, w1, b1, w2, b2, *, tm, single_buffer_weights):
    N, L, H = inputs.shape
    M = N * L
    dtype = inputs.dtype

    # Lane-dense hidden dim (multiple of 128) and an MXU-friendly row tile.
    Hp = max(128, _round_up(H, 128))
    tm_eff = min(tm, _round_up(M, 8))      # always a multiple of 8
    Mp = _round_up(M, tm_eff)

    # Host-side zero padding: padded columns/rows are provably zero-contribution
    # for the valid region and get sliced off afterwards.
    x2d = inputs.reshape(M, H)
    x2d = jnp.pad(x2d, ((0, Mp - M), (0, Hp - H)))

    def pad_wt(w):  # Conv1d weight (H_out, H_in) -> W^T padded to (Hp, Hp)
        return jnp.pad(w.T.astype(dtype), ((0, Hp - H), (0, Hp - H)))

    def pad_b(b):   # bias -> (1, Hp) f32 row
        return jnp.pad(b.astype(jnp.float32), (0, Hp - H)).reshape(1, Hp)

    w1t, w2t = pad_wt(w1), pad_wt(w2)
    b1r, b2r = pad_b(b1), pad_b(b2)

    # Scoped-VMEM budget: resident weights + double-buffered x/out tiles +
    # f32 intermediates.  Capped at 64 MiB so the request is valid on every
    # generation (v7x has 64 MiB of physical VMEM; v5e/v6e have 128 MiB).
    itemsize = jnp.dtype(dtype).itemsize
    weight_bufs = 1 if single_buffer_weights else 2
    est = (2 * weight_bufs * Hp * Hp * itemsize     # W1^T, W2^T
           + 2 * 2 * tm_eff * Hp * itemsize          # double-buffered x and out tiles
           + 2 * tm_eff * Hp * 4                     # f32 intermediates (h, y)
           + 4 * Hp * 4)                             # biases
    vmem_limit = int(min(max(2 * est, 32 * 1024 * 1024), 64 * 1024 * 1024))

    # Constant-index weight/bias blocks: single-buffer them when supported.
    const_kwargs = (
        dict(pipeline_mode=pl.Buffered(buffer_count=1))
        if single_buffer_weights else {}
    )
    w_spec = pl.BlockSpec((Hp, Hp), lambda i: (0, 0), **const_kwargs)
    b_spec = pl.BlockSpec((1, Hp), lambda i: (0, 0), **const_kwargs)

    out2d = pl.pallas_call(
        _ffn_kernel,
        out_shape=jax.ShapeDtypeStruct((Mp, Hp), dtype),
        grid_spec=pltpu.PrefetchScalarGridSpec(
            num_scalar_prefetch=0,
            grid=(Mp // tm_eff,),
            in_specs=[
                pl.BlockSpec((tm_eff, Hp), lambda i: (i, 0)),  # x row tile
                w_spec,                                        # W1^T (resident)
                b_spec,                                        # b1
                w_spec,                                        # W2^T (resident)
                b_spec,                                        # b2
            ],
            out_specs=pl.BlockSpec((tm_eff, Hp), lambda i: (i, 0)),
        ),
        compiler_params=pltpu.CompilerParams(
            dimension_semantics=("parallel",),     # row tiles shard across TCs (v7x)
            vmem_limit_bytes=vmem_limit,
        ),
    )(x2d, w1t, b1r, w2t, b2r)

    return out2d[:M, :H].reshape(N, L, H)


def ffn_forward(inputs, w1, b1, w2, b2, *, tm=512):
    """inputs: (N, L, H); w1/w2: (H, H) (Conv1d weight squeezed over k=1); b1/b2: (H,)."""
    try:
        out = _ffn_forward_impl(inputs, w1, b1, w2, b2, tm=tm,
                                single_buffer_weights=True)
        return jax.block_until_ready(out)
    except Exception:
        # Fallback for jax builds where BlockSpec(pipeline_mode=...) is unsupported.
        out = _ffn_forward_impl(inputs, w1, b1, w2, b2, tm=tm,
                                single_buffer_weights=False)
        return jax.block_until_ready(out)


def _reference(inputs, w1, b1, w2, b2):
    h = jnp.einsum("nlh,oh->nlo", inputs, w1) + b1
    h = jnp.maximum(h, 0.0)
    y = jnp.einsum("nlh,oh->nlo", h, w2) + b2
    return y + inputs


if __name__ == "__main__":
    # Small shapes consistent with the module: (batch, seq, hidden)
    N, L, H = 2, 8, 32
    key = jax.random.PRNGKey(0)
    k_x, k_w1, k_b1, k_w2, k_b2 = jax.random.split(key, 5)

    x = jax.random.normal(k_x, (N, L, H), dtype=jnp.float32)

    # Conv1d(H, H, kernel_size=1) parameters: weight (H, H, 1) squeezed to (H, H),
    # bias (H,), uniform(-1/sqrt(H), 1/sqrt(H)) like PyTorch's default init.
    bound = 1.0 / (H ** 0.5)
    w1 = jax.random.uniform(k_w1, (H, H), jnp.float32, -bound, bound)
    b1 = jax.random.uniform(k_b1, (H,), jnp.float32, -bound, bound)
    w2 = jax.random.uniform(k_w2, (H, H), jnp.float32, -bound, bound)
    b2 = jax.random.uniform(k_b2, (H,), jnp.float32, -bound, bound)

    out = ffn_forward(x, w1, b1, w2, b2)
    out = jax.block_until_ready(out)

    ref = _reference(x, w1, b1, w2, b2)
    assert out.shape == (N, L, H)
    assert jnp.allclose(out, ref, atol=1e-5, rtol=1e-5), "mismatch vs reference"

    print("KERNEL_OK")
</pallas_src>

<mosaic_0001>
module attributes {stable_mosaic.version = 11 : i64} {
  func.func @_ffn_kernel(%arg0: i32, %arg1: memref<16x128xf32, #tpu.memory_space<vmem>>, %arg2: memref<128x128xf32, #tpu.memory_space<vmem>>, %arg3: memref<1x128xf32, #tpu.memory_space<vmem>>, %arg4: memref<128x128xf32, #tpu.memory_space<vmem>>, %arg5: memref<1x128xf32, #tpu.memory_space<vmem>>, %arg6: memref<16x128xf32, #tpu.memory_space<vmem>>) attributes {dimension_semantics = [#tpu.dimension_semantics<parallel>], iteration_bounds = array<i64: 1>, scalar_prefetch = 0 : i64, scratch_operands = 0 : i64, tpu.core_type = #tpu.core_type<tc>, window_params = [{transform_indices = @transform_0, window_bounds = array<i64: 16, 128>}, {pipeline_mode = #tpu.pipeline_mode<synchronous>, transform_indices = @transform_1, window_bounds = array<i64: 128, 128>}, {pipeline_mode = #tpu.pipeline_mode<synchronous>, transform_indices = @transform_2, window_bounds = array<i64: 1, 128>}, {pipeline_mode = #tpu.pipeline_mode<synchronous>, transform_indices = @transform_3, window_bounds = array<i64: 128, 128>}, {pipeline_mode = #tpu.pipeline_mode<synchronous>, transform_indices = @transform_4, window_bounds = array<i64: 1, 128>}, {transform_indices = @transform_5, window_bounds = array<i64: 16, 128>}]} {
    %c0 = arith.constant 0 : index
    %c0_0 = arith.constant 0 : index
    %0 = vector.load %arg1[%c0, %c0_0] : memref<16x128xf32, #tpu.memory_space<vmem>>, vector<16x128xf32>
    %c0_1 = arith.constant 0 : index
    %c0_2 = arith.constant 0 : index
    %1 = vector.load %arg2[%c0_1, %c0_2] : memref<128x128xf32, #tpu.memory_space<vmem>>, vector<128x128xf32>
    %cst = arith.constant dense<0.000000e+00> : vector<16x128xf32>
    %2 = tpu.matmul %0, %1, %cst {dimension_numbers = #tpu.dot_dimension_numbers<[1], [0], [0], [1], [0, 0, 1, 1], [], []>} : vector<16x128xf32>, vector<128x128xf32>, vector<16x128xf32> -> vector<16x128xf32>
    %c0_3 = arith.constant 0 : index
    %c0_4 = arith.constant 0 : index
    %3 = vector.load %arg3[%c0_3, %c0_4] : memref<1x128xf32, #tpu.memory_space<vmem>>, vector<1x128xf32>
    %4 = vector.broadcast %3 : vector<1x128xf32> to vector<16x128xf32>
    %5 = arith.addf %2, %4 : vector<16x128xf32>
    %cst_5 = arith.constant 0.000000e+00 : f32
    %6 = vector.broadcast %cst_5 : f32 to vector<16x128xf32>
    %7 = arith.maximumf %5, %6 : vector<16x128xf32>
    %c0_6 = arith.constant 0 : index
    %c0_7 = arith.constant 0 : index
    %8 = vector.load %arg4[%c0_6, %c0_7] : memref<128x128xf32, #tpu.memory_space<vmem>>, vector<128x128xf32>
    %cst_8 = arith.constant dense<0.000000e+00> : vector<16x128xf32>
    %9 = tpu.matmul %7, %8, %cst_8 {dimension_numbers = #tpu.dot_dimension_numbers<[1], [0], [0], [1], [0, 0, 1, 1], [], []>} : vector<16x128xf32>, vector<128x128xf32>, vector<16x128xf32> -> vector<16x128xf32>
    %c0_9 = arith.constant 0 : index
    %c0_10 = arith.constant 0 : index
    %10 = vector.load %arg5[%c0_9, %c0_10] : memref<1x128xf32, #tpu.memory_space<vmem>>, vector<1x128xf32>
    %11 = vector.broadcast %10 : vector<1x128xf32> to vector<16x128xf32>
    %12 = arith.addf %9, %11 : vector<16x128xf32>
    %13 = arith.addf %12, %0 : vector<16x128xf32>
    %c0_11 = arith.constant 0 : index
    %c0_12 = arith.constant 0 : index
    %14 = vector.load %arg6[%c0_11, %c0_12] : memref<16x128xf32, #tpu.memory_space<vmem>>, vector<16x128xf32>
    tpu.vector_store %arg6[%c0_11, %c0_12], %13 {strides = array<i32>} : memref<16x128xf32, #tpu.memory_space<vmem>>, vector<16x128xf32>,
    return
  }
  func.func @transform_0(%arg0: i32) -> (i32, i32) {
    %c0_i32 = arith.constant 0 : i32
    %c0_i32_0 = arith.constant 0 : i32
    return %arg0, %c0_i32 : i32, i32
  }
  func.func @transform_1(%arg0: i32) -> (i32, i32) {
    %c0_i32 = arith.constant 0 : i32
    %c0_i32_0 = arith.constant 0 : i32
    %c0_i32_1 = arith.constant 0 : i32
    return %c0_i32, %c0_i32_0 : i32, i32
  }
  func.func @transform_2(%arg0: i32) -> (i32, i32) {
    %c0_i32 = arith.constant 0 : i32
    %c0_i32_0 = arith.constant 0 : i32
    %c0_i32_1 = arith.constant 0 : i32
    return %c0_i32, %c0_i32_0 : i32, i32
  }
  func.func @transform_3(%arg0: i32) -> (i32, i32) {
    %c0_i32 = arith.constant 0 : i32
    %c0_i32_0 = arith.constant 0 : i32
    %c0_i32_1 = arith.constant 0 : i32
    return %c0_i32, %c0_i32_0 : i32, i32
  }
  func.func @transform_4(%arg0: i32) -> (i32, i32) {
    %c0_i32 = arith.constant 0 : i32
    %c0_i32_0 = arith.constant 0 : i32
    %c0_i32_1 = arith.constant 0 : i32
    return %c0_i32, %c0_i32_0 : i32, i32
  }
  func.func @transform_5(%arg0: i32) -> (i32, i32) {
    %c0_i32 = arith.constant 0 : i32
    %c0_i32_0 = arith.constant 0 : i32
    return %arg0, %c0_i32 : i32, i32
  }
}

module attributes {stable_mosaic.version = 11 : i64} {
  func.func @_ffn_kernel(%arg0: i32, %arg1: memref<16x128xf32, #tpu.memory_space<vmem>>, %arg2: memref<128x128xf32, #tpu.memory_space<vmem>>, %arg3: memref<1x128xf32, #tpu.memory_space<vmem>>, %arg4: memref<128x128xf32, #tpu.memory_space<vmem>>, %arg5: memref<1x128xf32, #tpu.memory_space<vmem>>, %arg6: memref<16x128xf32, #tpu.memory_space<vmem>>) attributes {dimension_semantics = [#tpu.dimension_semantics<parallel>], iteration_bounds = array<i64: 1>, scalar_prefetch = 0 : i64, scratch_operands = 0 : i64, tpu.core_type = #tpu.core_type<tc>, window_params = [{transform_indices = @transform_0, window_bounds = array<i64: 16, 128>}, {pipeline_mode = #tpu.pipeline_mode<synchronous>, transform_indices = @transform_1, window_bounds = array<i64: 128, 128>}, {pipeline_mode = #tpu.pipeline_mode<synchronous>, transform_indices = @transform_2, window_bounds = array<i64: 1, 128>}, {pipeline_mode = #tpu.pipeline_mode<synchronous>, transform_indices = @transform_3, window_bounds = array<i64: 128, 128>}, {pipeline_mode = #tpu.pipeline_mode<synchronous>, transform_indices = @transform_4, window_bounds = array<i64: 1, 128>}, {transform_indices = @transform_5, window_bounds = array<i64: 16, 128>}]} {
    %c0 = arith.constant 0 : index
    %c0_0 = arith.constant 0 : index
    %0 = vector.load %arg1[%c0, %c0_0] : memref<16x128xf32, #tpu.memory_space<vmem>>, vector<16x128xf32>
    %c0_1 = arith.constant 0 : index
    %c0_2 = arith.constant 0 : index
    %1 = vector.load %arg2[%c0_1, %c0_2] : memref<128x128xf32, #tpu.memory_space<vmem>>, vector<128x128xf32>
    %cst = arith.constant dense<0.000000e+00> : vector<16x128xf32>
    %2 = tpu.matmul %0, %1, %cst {dimension_numbers = #tpu.dot_dimension_numbers<[1], [0], [0], [1], [0, 0, 1, 1], [], []>} : vector<16x128xf32>, vector<128x128xf32>, vector<16x128xf32> -> vector<16x128xf32>
    %c0_3 = arith.constant 0 : index
    %c0_4 = arith.constant 0 : index
    %3 = vector.load %arg3[%c0_3, %c0_4] : memref<1x128xf32, #tpu.memory_space<vmem>>, vector<1x128xf32>
    %4 = vector.broadcast %3 : vector<1x128xf32> to vector<16x128xf32>
    %5 = arith.addf %2, %4 : vector<16x128xf32>
    %cst_5 = arith.constant 0.000000e+00 : f32
    %6 = vector.broadcast %cst_5 : f32 to vector<16x128xf32>
    %7 = arith.maximumf %5, %6 : vector<16x128xf32>
    %c0_6 = arith.constant 0 : index
    %c0_7 = arith.constant 0 : index
    %8 = vector.load %arg4[%c0_6, %c0_7] : memref<128x128xf32, #tpu.memory_space<vmem>>, vector<128x128xf32>
    %cst_8 = arith.constant dense<0.000000e+00> : vector<16x128xf32>
    %9 = tpu.matmul %7, %8, %cst_8 {dimension_numbers = #tpu.dot_dimension_numbers<[1], [0], [0], [1], [0, 0, 1, 1], [], []>} : vector<16x128xf32>, vector<128x128xf32>, vector<16x128xf32> -> vector<16x128xf32>
    %c0_9 = arith.constant 0 : index
    %c0_10 = arith.constant 0 : index
    %10 = vector.load %arg5[%c0_9, %c0_10] : memref<1x128xf32, #tpu.memory_space<vmem>>, vector<1x128xf32>
    %11 = vector.broadcast %10 : vector<1x128xf32> to vector<16x128xf32>
    %12 = arith.addf %9, %11 : vector<16x128xf32>
    %13 = arith.addf %12, %0 : vector<16x128xf32>
    %c0_11 = arith.constant 0 : index
    %c0_12 = arith.constant 0 : index
    %14 = vector.load %arg6[%c0_11, %c0_12] : memref<16x128xf32, #tpu.memory_space<vmem>>, vector<16x128xf32>
    tpu.vector_store %arg6[%c0_11, %c0_12], %13 {strides = array<i32>} : memref<16x128xf32, #tpu.memory_space<vmem>>, vector<16x128xf32>,
    return
  }
  func.func @transform_0(%arg0: i32) -> (i32, i32) {
    %c0_i32 = arith.constant 0 : i32
    %c0_i32_0 = arith.constant 0 : i32
    return %arg0, %c0_i32 : i32, i32
  }
  func.func @transform_1(%arg0: i32) -> (i32, i32) {
    %c0_i32 = arith.constant 0 : i32
    %c0_i32_0 = arith.constant 0 : i32
    %c0_i32_1 = arith.constant 0 : i32
    return %c0_i32, %c0_i32_0 : i32, i32
  }
  func.func @transform_2(%arg0: i32) -> (i32, i32) {
    %c0_i32 = arith.constant 0 : i32
    %c0_i32_0 = arith.constant 0 : i32
    %c0_i32_1 = arith.constant 0 : i32
    return %c0_i32, %c0_i32_0 : i32, i32
  }
  func.func @transform_3(%arg0: i32) -> (i32, i32) {
    %c0_i32 = arith.constant 0 : i32
    %c0_i32_0 = arith.constant 0 : i32
    %c0_i32_1 = arith.constant 0 : i32
    return %c0_i32, %c0_i32_0 : i32, i32
  }
  func.func @transform_4(%arg0: i32) -> (i32, i32) {
    %c0_i32 = arith.constant 0 : i32
    %c0_i32_0 = arith.constant 0 : i32
    %c0_i32_1 = arith.constant 0 : i32
    return %c0_i32, %c0_i32_0 : i32, i32
  }
  func.func @transform_5(%arg0: i32) -> (i32, i32) {
    %c0_i32 = arith.constant 0 : i32
    %c0_i32_0 = arith.constant 0 : i32
    return %arg0, %c0_i32 : i32, i32
  }
}

</mosaic_0001>

<llo_original>
// kernel: _ffn_forward_impl.1
$region0: #{_ffn_forward_impl.1}
  #allocation0 [shape = 'u32[]', space=smem, size = 0x4, offset = 0x4, fixed_abs, tag = 'smem constant byte address 0x4 - core index']
  #allocation1 [shape = 'u32[144,128]{1,0:T(1,128)}', space=vmem, size = 0x12000, scoped, tag = 'internal scratch']
  %s0 = inlined_call_operand.vmem [shape: f32[16,128], index: 0, kind: input, shape index: {}]
  %s1 = inlined_call_operand.vmem [shape: f32[128,128], index: 1, kind: input, shape index: {}]
  %s2 = inlined_call_operand.vmem [shape: f32[1,128], index: 2, kind: input, shape index: {}]
  %s3 = inlined_call_operand.vmem [shape: f32[128,128], index: 3, kind: input, shape index: {}]
  %s4 = inlined_call_operand.vmem [shape: f32[1,128], index: 4, kind: input, shape index: {}]
  %s5 = inlined_call_operand.vmem [shape: f32[16,128], index: 5, kind: output, shape index: {}]
  %s6 = sld [smem:[#allocation0]]
  $region30: #{_ffn_forward_impl.1} parent=0
    _
  %s8 = ssub.s32 1, %s6
  %s9 = scalar_select 0, %s8, %s6
  // Predicated region
  $region2: #{_ffn_forward_impl.1} parent=0 // pred_check
    _
  $region3: #{_ffn_forward_impl.1} parent=0 // pred_check_branch
    %11 = sbr.rel (0) target = $region5
  $region4: #{_ffn_forward_impl.1} parent=0 // pred_region
    _
  $region5: #{_ffn_forward_impl.1} parent=0 // pred_fallthru
    _
  // Predicated region
  $region6: #{_ffn_forward_impl.1} parent=0 // pred_check
    _
  $region7: #{_ffn_forward_impl.1} parent=0 // pred_check_branch
    %13 = sbr.rel (0) target = $region9
  $region8: #{_ffn_forward_impl.1} parent=0 // pred_region
    _
  $region9: #{_ffn_forward_impl.1} parent=0 // pred_fallthru
    _
  // Predicated region
  $region10: #{_ffn_forward_impl.1} parent=0 // pred_check
    _
  $region11: #{_ffn_forward_impl.1} parent=0 // pred_check_branch
    %15 = sbr.rel (0) target = $region13
  $region12: #{_ffn_forward_impl.1} parent=0 // pred_region
    _
  $region13: #{_ffn_forward_impl.1} parent=0 // pred_fallthru
    _
  // Predicated region
  $region14: #{_ffn_forward_impl.1} parent=0 // pred_check
    _
  $region15: #{_ffn_forward_impl.1} parent=0 // pred_check_branch
    %17 = sbr.rel (0) target = $region17
  $region16: #{_ffn_forward_impl.1} parent=0 // pred_region
    _
  $region17: #{_ffn_forward_impl.1} parent=0 // pred_fallthru
    _
  // Predicated region
  $region18: #{_ffn_forward_impl.1} parent=0 // pred_check
    _
  $region19: #{_ffn_forward_impl.1} parent=0 // pred_check_branch
    %19 = sbr.rel (0) target = $region21
  $region20: #{_ffn_forward_impl.1} parent=0 // pred_region
    _
  $region21: #{_ffn_forward_impl.1} parent=0 // pred_fallthru
    _
  %v20 = vld [vmem:[%s0] sm:$0xff]
  %v21 = vld [vmem:[%s0 + $0x8] sm:$0xff]
  %v22 = vld [vmem:[%s1] sm:$0xff]
  %v23 = vld [vmem:[%s1 + $0x8] sm:$0xff]
  %v24 = vld [vmem:[%s1 + $0x10] sm:$0xff]
  %v25 = vld [vmem:[%s1 + $0x18] sm:$0xff]
  %v26 = vld [vmem:[%s1 + $0x20] sm:$0xff]
  %v27 = vld [vmem:[%s1 + $0x28] sm:$0xff]
  %v28 = vld [vmem:[%s1 + $0x30] sm:$0xff]
  %v29 = vld [vmem:[%s1 + $0x38] sm:$0xff]
  %v30 = vld [vmem:[%s1 + $0x40] sm:$0xff]
  %v31 = vld [vmem:[%s1 + $0x48] sm:$0xff]
  %v32 = vld [vmem:[%s1 + $0x50] sm:$0xff]
  %v33 = vld [vmem:[%s1 + $0x58] sm:$0xff]
  %v34 = vld [vmem:[%s1 + $0x60] sm:$0xff]
  %v35 = vld [vmem:[%s1 + $0x68] sm:$0xff]
  %v36 = vld [vmem:[%s1 + $0x70] sm:$0xff]
  %v37 = vld [vmem:[%s1 + $0x78] sm:$0xff]
  %v38 = vld [vmem:[%s2] sm:$0x1]
  %v40 = vlaneseq
  %v41 = vshrl.u32 %v40, 7
  %v42 = vsub.s32 0, %v41
  %v43 = vrot.slane %v38, %v42
  %45 = vmatprep.subr.mxu0 0.0
  %46 = vmatpush1.msra.mxu0 %v22
  %47 = vmatprep.subr.mxu0 0.0
  %48 = vmatpush1.msra.mxu0 %v23
  %49 = vmatprep.subr.mxu0 0.0
  %50 = vmatpush1.msra.mxu0 %v24
  %51 = vmatprep.subr.mxu0 0.0
  %52 = vmatpush1.msra.mxu0 %v25
  %53 = vmatprep.subr.mxu0 0.0
  %54 = vmatpush1.msra.mxu0 %v26
  %55 = vmatprep.subr.mxu0 0.0
  %56 = vmatpush1.msra.mxu0 %v27
  %57 = vmatprep.subr.mxu0 0.0
  %58 = vmatpush1.msra.mxu0 %v28
  %59 = vmatprep.subr.mxu0 0.0
  %60 = vmatpush1.msra.mxu0 %v29
  %61 = vmatprep.subr.mxu0 0.0
  %62 = vmatpush1.msra.mxu0 %v30
  %63 = vmatprep.subr.mxu0 0.0
  %64 = vmatpush1.msra.mxu0 %v31
  %65 = vmatprep.subr.mxu0 0.0
  %66 = vmatpush1.msra.mxu0 %v32
  %67 = vmatprep.subr.mxu0 0.0
  %68 = vmatpush1.msra.mxu0 %v33
  %69 = vmatprep.subr.mxu0 0.0
  %70 = vmatpush1.msra.mxu0 %v34
  %71 = vmatprep.subr.mxu0 0.0
  %72 = vmatpush1.msra.mxu0 %v35
  %73 = vmatprep.subr.mxu0 0.0
  %74 = vmatpush1.msra.mxu0 %v36
  %75 = vmatprep.subr.mxu0 0.0
  %76 = vmatpush1.msra.mxu0 %v37
  %77 = vmatprep.subr.mxu0 0.0
  %78 = vmatpush1.msra.mxu0 0.0
  %79 = vmatprep.subr.mxu0 0.0
  %80 = vmatpush1.msra.mxu0 0.0
  %81 = vmatprep.subr.mxu0 0.0
  %82 = vmatpush1.msra.mxu0 0.0
  %83 = vmatprep.subr.mxu0 0.0
  %84 = vmatpush1.msra.mxu0 0.0
  %85 = vmatprep.subr.mxu0 0.0
  %86 = vmatpush1.msra.mxu0 0.0
  %87 = vmatprep.subr.mxu0 0.0
  %88 = vmatpush1.msra.mxu0 0.0
  %89 = vmatprep.subr.mxu0 0.0
  %90 = vmatpush1.msra.mxu0 0.0
  %91 = vmatprep.subr.mxu0 0.0
  %92 = vmatpush1.msra.mxu0 0.0
  %93 = vmatprep.subr.mxu0 0.0
  %94 = vmatpush1.msra.mxu0 0.0
  %95 = vmatprep.subr.mxu0 0.0
  %96 = vmatpush1.msra.mxu0 0.0
  %97 = vmatprep.subr.mxu0 0.0
  %98 = vmatpush1.msra.mxu0 0.0
  %99 = vmatprep.subr.mxu0 0.0
  %100 = vmatpush1.msra.mxu0 0.0
  %101 = vmatprep.subr.mxu0 0.0
  %102 = vmatpush1.msra.mxu0 0.0
  %103 = vmatprep.subr.mxu0 0.0
  %104 = vmatpush1.msra.mxu0 0.0
  %105 = vmatprep.subr.mxu0 0.0
  %106 = vmatpush1.msra.mxu0 0.0
  %107 = vmatprep.subr.mxu0 0.0
  %108 = vmatpush1.msra.mxu0 0.0
  %109 = vmatprep.mubr.f32.mxu0 0.0
  %110 = vmatmul.mubr.f32.gmra.mrb[0].mxu0 %v20
  %v111 = vpop.f32.mrb[0].mxu0
  %v112 = vadd.f32 %v43, %v111
  %v113 = vpop.f32.mrb[0].mxu0
  %114 = vmatprep.mubr.f32.mxu0 0.0
  %115 = vmatmul.mubr.f32.gmra.mrb[0].mxu0 %v21
  %v116 = vpop.f32.mrb[0].mxu0
  %v117 = vadd.f32 %v43, %v116
  %v118 = vpop.f32.mrb[0].mxu0
  %119 = vdwg.mxu0
  %v120 = vmax.f32 %v112, 0.0
  %v121 = vmax.f32 %v117, 0.0
  %v122 = vld [vmem:[%s3] sm:$0xff]
  %v123 = vld [vmem:[%s3 + $0x8] sm:$0xff]
  %v124 = vld [vmem:[%s3 + $0x10] sm:$0xff]
  %v125 = vld [vmem:[%s3 + $0x18] sm:$0xff]
  %v126 = vld [vmem:[%s3 + $0x20] sm:$0xff]
  %v127 = vld [vmem:[%s3 + $0x28] sm:$0xff]
  %v128 = vld [vmem:[%s3 + $0x30] sm:$0xff]
  %v129 = vld [vmem:[%s3 + $0x38] sm:$0xff]
  %v130 = vld [vmem:[%s3 + $0x40] sm:$0xff]
  %v131 = vld [vmem:[%s3 + $0x48] sm:$0xff]
  %v132 = vld [vmem:[%s3 + $0x50] sm:$0xff]
  %v133 = vld [vmem:[%s3 + $0x58] sm:$0xff]
  %v134 = vld [vmem:[%s3 + $0x60] sm:$0xff]
  %v135 = vld [vmem:[%s3 + $0x68] sm:$0xff]
  %v136 = vld [vmem:[%s3 + $0x70] sm:$0xff]
  %v137 = vld [vmem:[%s3 + $0x78] sm:$0xff]
  %v138 = vld [vmem:[%s4] sm:$0x1]
  %v140 = vlaneseq
  %v141 = vshrl.u32 %v140, 7
  %v142 = vsub.s32 0, %v141
  %v143 = vrot.slane %v138, %v142
  %145 = vmatprep.subr.mxu0 0.0
  %146 = vmatpush1.msra.mxu0 %v122
  %147 = vmatprep.subr.mxu0 0.0
  %148 = vmatpush1.msra.mxu0 %v123
  %149 = vmatprep.subr.mxu0 0.0
  %150 = vmatpush1.msra.mxu0 %v124
  %151 = vmatprep.subr.mxu0 0.0
  %152 = vmatpush1.msra.mxu0 %v125
  %153 = vmatprep.subr.mxu0 0.0
  %154 = vmatpush1.msra.mxu0 %v126
  %155 = vmatprep.subr.mxu0 0.0
  %156 = vmatpush1.msra.mxu0 %v127
  %157 = vmatprep.subr.mxu0 0.0
  %158 = vmatpush1.msra.mxu0 %v128
  %159 = vmatprep.subr.mxu0 0.0
  %160 = vmatpush1.msra.mxu0 %v129
  %161 = vmatprep.subr.mxu0 0.0
  %162 = vmatpush1.msra.mxu0 %v130
  %163 = vmatprep.subr.mxu0 0.0
  %164 = vmatpush1.msra.mxu0 %v131
  %165 = vmatprep.subr.mxu0 0.0
  %166 = vmatpush1.msra.mxu0 %v132
  %167 = vmatprep.subr.mxu0 0.0
  %168 = vmatpush1.msra.mxu0 %v133
  %169 = vmatprep.subr.mxu0 0.0
  %170 = vmatpush1.msra.mxu0 %v134
  %171 = vmatprep.subr.mxu0 0.0
  %172 = vmatpush1.msra.mxu0 %v135
  %173 = vmatprep.subr.mxu0 0.0
  %174 = vmatpush1.msra.mxu0 %v136
  %175 = vmatprep.subr.mxu0 0.0
  %176 = vmatpush1.msra.mxu0 %v137
  %177 = vmatprep.subr.mxu0 0.0
  %178 = vmatpush1.msra.mxu0 0.0
  %179 = vmatprep.subr.mxu0 0.0
  %180 = vmatpush1.msra.mxu0 0.0
  %181 = vmatprep.subr.mxu0 0.0
  %182 = vmatpush1.msra.mxu0 0.0
  %183 = vmatprep.subr.mxu0 0.0
  %184 = vmatpush1.msra.mxu0 0.0
  %185 = vmatprep.subr.mxu0 0.0
  %186 = vmatpush1.msra.mxu0 0.0
  %187 = vmatprep.subr.mxu0 0.0
  %188 = vmatpush1.msra.mxu0 0.0
  %189 = vmatprep.subr.mxu0 0.0
  %190 = vmatpush1.msra.mxu0 0.0
  %191 = vmatprep.subr.mxu0 0.0
  %192 = vmatpush1.msra.mxu0 0.0
  %193 = vmatprep.subr.mxu0 0.0
  %194 = vmatpush1.msra.mxu0 0.0
  %195 = vmatprep.subr.mxu0 0.0
  %196 = vmatpush1.msra.mxu0 0.0
  %197 = vmatprep.subr.mxu0 0.0
  %198 = vmatpush1.msra.mxu0 0.0
  %199 = vmatprep.subr.mxu0 0.0
  %200 = vmatpush1.msra.mxu0 0.0
  %201 = vmatprep.subr.mxu0 0.0
  %202 = vmatpush1.msra.mxu0 0.0
  %203 = vmatprep.subr.mxu0 0.0
  %204 = vmatpush1.msra.mxu0 0.0
  %205 = vmatprep.subr.mxu0 0.0
  %206 = vmatpush1.msra.mxu0 0.0
  %207 = vmatprep.subr.mxu0 0.0
  %208 = vmatpush1.msra.mxu0 0.0
  %209 = vmatprep.mubr.f32.mxu0 0.0
  %210 = vmatmul.mubr.f32.gmra.mrb[0].mxu0 %v120
  %v211 = vpop.f32.mrb[0].mxu0
  %v212 = vadd.f32 %v143, %v211
  %v213 = vpop.f32.mrb[0].mxu0
  %214 = vmatprep.mubr.f32.mxu0 0.0
  %215 = vmatmul.mubr.f32.gmra.mrb[0].mxu0 %v121
  %v216 = vpop.f32.mrb[0].mxu0
  %v217 = vadd.f32 %v143, %v216
  %v218 = vpop.f32.mrb[0].mxu0
  %219 = vdwg.mxu0
  %v220 = vadd.f32 %v212, %v20
  %v221 = vadd.f32 %v217, %v21
  %222 = vst [vmem:[%s5] sm:$0xff] %v220
  %223 = vst [vmem:[%s5 + $0x8] sm:$0xff] %v221
  // Predicated region
  $region22: #{_ffn_forward_impl.1} parent=0 // pred_check
    _
  $region23: #{_ffn_forward_impl.1} parent=0 // pred_check_branch
    %225 = sbr.rel (0) target = $region25
  $region24: #{_ffn_forward_impl.1} parent=0 // pred_region
    _
  $region25: #{_ffn_forward_impl.1} parent=0 // pred_fallthru
    _
  // Predicated region
  $region26: #{_ffn_forward_impl.1} parent=0 // pred_check
    _
  $region27: #{_ffn_forward_impl.1} parent=0 // pred_check_branch
    %227 = sbr.rel (0) target = $region29
  $region28: #{_ffn_forward_impl.1} parent=0 // pred_region
    _
  $region29: #{_ffn_forward_impl.1} parent=0 // pred_fallthru
    _

// kernel: _ffn_forward_impl.1
$region0: #{_ffn_forward_impl.1}
  #allocation0 [shape = 'u32[]', space=smem, size = 0x4, offset = 0x4, fixed_abs, tag = 'smem constant byte address 0x4 - core index']
  #allocation1 [shape = 'u32[144,128]{1,0:T(1,128)}', space=vmem, size = 0x12000, scoped, tag = 'internal scratch']
  %s0 = inlined_call_operand.vmem [shape: f32[16,128], index: 0, kind: input, shape index: {}]
  %s1 = inlined_call_operand.vmem [shape: f32[128,128], index: 1, kind: input, shape index: {}]
  %s2 = inlined_call_operand.vmem [shape: f32[1,128], index: 2, kind: input, shape index: {}]
  %s3 = inlined_call_operand.vmem [shape: f32[128,128], index: 3, kind: input, shape index: {}]
  %s4 = inlined_call_operand.vmem [shape: f32[1,128], index: 4, kind: input, shape index: {}]
  %s5 = inlined_call_operand.vmem [shape: f32[16,128], index: 5, kind: output, shape index: {}]
  %s6 = sld [smem:[#allocation0]]
  $region30: #{_ffn_forward_impl.1} parent=0
    _
  %s8 = ssub.s32 1, %s6
  %s9 = scalar_select 0, %s8, %s6
  // Predicated region
  $region2: #{_ffn_forward_impl.1} parent=0 // pred_check
    _
  $region3: #{_ffn_forward_impl.1} parent=0 // pred_check_branch
    %11 = sbr.rel (0) target = $region5
  $region4: #{_ffn_forward_impl.1} parent=0 // pred_region
    _
  $region5: #{_ffn_forward_impl.1} parent=0 // pred_fallthru
    _
  // Predicated region
  $region6: #{_ffn_forward_impl.1} parent=0 // pred_check
    _
  $region7: #{_ffn_forward_impl.1} parent=0 // pred_check_branch
    %13 = sbr.rel (0) target = $region9
  $region8: #{_ffn_forward_impl.1} parent=0 // pred_region
    _
  $region9: #{_ffn_forward_impl.1} parent=0 // pred_fallthru
    _
  // Predicated region
  $region10: #{_ffn_forward_impl.1} parent=0 // pred_check
    _
  $region11: #{_ffn_forward_impl.1} parent=0 // pred_check_branch
    %15 = sbr.rel (0) target = $region13
  $region12: #{_ffn_forward_impl.1} parent=0 // pred_region
    _
  $region13: #{_ffn_forward_impl.1} parent=0 // pred_fallthru
    _
  // Predicated region
  $region14: #{_ffn_forward_impl.1} parent=0 // pred_check
    _
  $region15: #{_ffn_forward_impl.1} parent=0 // pred_check_branch
    %17 = sbr.rel (0) target = $region17
  $region16: #{_ffn_forward_impl.1} parent=0 // pred_region
    _
  $region17: #{_ffn_forward_impl.1} parent=0 // pred_fallthru
    _
  // Predicated region
  $region18: #{_ffn_forward_impl.1} parent=0 // pred_check
    _
  $region19: #{_ffn_forward_impl.1} parent=0 // pred_check_branch
    %19 = sbr.rel (0) target = $region21
  $region20: #{_ffn_forward_impl.1} parent=0 // pred_region
    _
  $region21: #{_ffn_forward_impl.1} parent=0 // pred_fallthru
    _
  %v20 = vld [vmem:[%s0] sm:$0xff]
  %v21 = vld [vmem:[%s0 + $0x8] sm:$0xff]
  %v22 = vld [vmem:[%s1] sm:$0xff]
  %v23 = vld [vmem:[%s1 + $0x8] sm:$0xff]
  %v24 = vld [vmem:[%s1 + $0x10] sm:$0xff]
  %v25 = vld [vmem:[%s1 + $0x18] sm:$0xff]
  %v26 = vld [vmem:[%s1 + $0x20] sm:$0xff]
  %v27 = vld [vmem:[%s1 + $0x28] sm:$0xff]
  %v28 = vld [vmem:[%s1 + $0x30] sm:$0xff]
  %v29 = vld [vmem:[%s1 + $0x38] sm:$0xff]
  %v30 = vld [vmem:[%s1 + $0x40] sm:$0xff]
  %v31 = vld [vmem:[%s1 + $0x48] sm:$0xff]
  %v32 = vld [vmem:[%s1 + $0x50] sm:$0xff]
  %v33 = vld [vmem:[%s1 + $0x58] sm:$0xff]
  %v34 = vld [vmem:[%s1 + $0x60] sm:$0xff]
  %v35 = vld [vmem:[%s1 + $0x68] sm:$0xff]
  %v36 = vld [vmem:[%s1 + $0x70] sm:$0xff]
  %v37 = vld [vmem:[%s1 + $0x78] sm:$0xff]
  %v38 = vld [vmem:[%s2] sm:$0x1]
  %v40 = vlaneseq
  %v41 = vshrl.u32 %v40, 7
  %v42 = vsub.s32 0, %v41
  %v43 = vrot.slane %v38, %v42
  %45 = vmatprep.subr.mxu0 0.0
  %46 = vmatpush1.msra.mxu0 %v22
  %47 = vmatprep.subr.mxu0 0.0
  %48 = vmatpush1.msra.mxu0 %v23
  %49 = vmatprep.subr.mxu0 0.0
  %50 = vmatpush1.msra.mxu0 %v24
  %51 = vmatprep.subr.mxu0 0.0
  %52 = vmatpush1.msra.mxu0 %v25
  %53 = vmatprep.subr.mxu0 0.0
  %54 = vmatpush1.msra.mxu0 %v26
  %55 = vmatprep.subr.mxu0 0.0
  %56 = vmatpush1.msra.mxu0 %v27
  %57 = vmatprep.subr.mxu0 0.0
  %58 = vmatpush1.msra.mxu0 %v28
  %59 = vmatprep.subr.mxu0 0.0
  %60 = vmatpush1.msra.mxu0 %v29
  %61 = vmatprep.subr.mxu0 0.0
  %62 = vmatpush1.msra.mxu0 %v30
  %63 = vmatprep.subr.mxu0 0.0
  %64 = vmatpush1.msra.mxu0 %v31
  %65 = vmatprep.subr.mxu0 0.0
  %66 = vmatpush1.msra.mxu0 %v32
  %67 = vmatprep.subr.mxu0 0.0
  %68 = vmatpush1.msra.mxu0 %v33
  %69 = vmatprep.subr.mxu0 0.0
  %70 = vmatpush1.msra.mxu0 %v34
  %71 = vmatprep.subr.mxu0 0.0
  %72 = vmatpush1.msra.mxu0 %v35
  %73 = vmatprep.subr.mxu0 0.0
  %74 = vmatpush1.msra.mxu0 %v36
  %75 = vmatprep.subr.mxu0 0.0
  %76 = vmatpush1.msra.mxu0 %v37
  %77 = vmatprep.subr.mxu0 0.0
  %78 = vmatpush1.msra.mxu0 0.0
  %79 = vmatprep.subr.mxu0 0.0
  %80 = vmatpush1.msra.mxu0 0.0
  %81 = vmatprep.subr.mxu0 0.0
  %82 = vmatpush1.msra.mxu0 0.0
  %83 = vmatprep.subr.mxu0 0.0
  %84 = vmatpush1.msra.mxu0 0.0
  %85 = vmatprep.subr.mxu0 0.0
  %86 = vmatpush1.msra.mxu0 0.0
  %87 = vmatprep.subr.mxu0 0.0
  %88 = vmatpush1.msra.mxu0 0.0
  %89 = vmatprep.subr.mxu0 0.0
  %90 = vmatpush1.msra.mxu0 0.0
  %91 = vmatprep.subr.mxu0 0.0
  %92 = vmatpush1.msra.mxu0 0.0
  %93 = vmatprep.subr.mxu0 0.0
  %94 = vmatpush1.msra.mxu0 0.0
  %95 = vmatprep.subr.mxu0 0.0
  %96 = vmatpush1.msra.mxu0 0.0
  %97 = vmatprep.subr.mxu0 0.0
  %98 = vmatpush1.msra.mxu0 0.0
  %99 = vmatprep.subr.mxu0 0.0
  %100 = vmatpush1.msra.mxu0 0.0
  %101 = vmatprep.subr.mxu0 0.0
  %102 = vmatpush1.msra.mxu0 0.0
  %103 = vmatprep.subr.mxu0 0.0
  %104 = vmatpush1.msra.mxu0 0.0
  %105 = vmatprep.subr.mxu0 0.0
  %106 = vmatpush1.msra.mxu0 0.0
  %107 = vmatprep.subr.mxu0 0.0
  %108 = vmatpush1.msra.mxu0 0.0
  %109 = vmatprep.mubr.f32.mxu0 0.0
  %110 = vmatmul.mubr.f32.gmra.mrb[0].mxu0 %v20
  %v111 = vpop.f32.mrb[0].mxu0
  %v112 = vadd.f32 %v43, %v111
  %v113 = vpop.f32.mrb[0].mxu0
  %114 = vmatprep.mubr.f32.mxu0 0.0
  %115 = vmatmul.mubr.f32.gmra.mrb[0].mxu0 %v21
  %v116 = vpop.f32.mrb[0].mxu0
  %v117 = vadd.f32 %v43, %v116
  %v118 = vpop.f32.mrb[0].mxu0
  %119 = vdwg.mxu0
  %v120 = vmax.f32 %v112, 0.0
  %v121 = vmax.f32 %v117, 0.0
  %v122 = vld [vmem:[%s3] sm:$0xff]
  %v123 = vld [vmem:[%s3 + $0x8] sm:$0xff]
  %v124 = vld [vmem:[%s3 + $0x10] sm:$0xff]
  %v125 = vld [vmem:[%s3 + $0x18] sm:$0xff]
  %v126 = vld [vmem:[%s3 + $0x20] sm:$0xff]
  %v127 = vld [vmem:[%s3 + $0x28] sm:$0xff]
  %v128 = vld [vmem:[%s3 + $0x30] sm:$0xff]
  %v129 = vld [vmem:[%s3 + $0x38] sm:$0xff]
  %v130 = vld [vmem:[%s3 + $0x40] sm:$0xff]
  %v131 = vld [vmem:[%s3 + $0x48] sm:$0xff]
  %v132 = vld [vmem:[%s3 + $0x50] sm:$0xff]
  %v133 = vld [vmem:[%s3 + $0x58] sm:$0xff]
  %v134 = vld [vmem:[%s3 + $0x60] sm:$0xff]
  %v135 = vld [vmem:[%s3 + $0x68] sm:$0xff]
  %v136 = vld [vmem:[%s3 + $0x70] sm:$0xff]
  %v137 = vld [vmem:[%s3 + $0x78] sm:$0xff]
  %v138 = vld [vmem:[%s4] sm:$0x1]
  %v140 = vlaneseq
  %v141 = vshrl.u32 %v140, 7
  %v142 = vsub.s32 0, %v141
  %v143 = vrot.slane %v138, %v142
  %145 = vmatprep.subr.mxu0 0.0
  %146 = vmatpush1.msra.mxu0 %v122
  %147 = vmatprep.subr.mxu0 0.0
  %148 = vmatpush1.msra.mxu0 %v123
  %149 = vmatprep.subr.mxu0 0.0
  %150 = vmatpush1.msra.mxu0 %v124
  %151 = vmatprep.subr.mxu0 0.0
  %152 = vmatpush1.msra.mxu0 %v125
  %153 = vmatprep.subr.mxu0 0.0
  %154 = vmatpush1.msra.mxu0 %v126
  %155 = vmatprep.subr.mxu0 0.0
  %156 = vmatpush1.msra.mxu0 %v127
  %157 = vmatprep.subr.mxu0 0.0
  %158 = vmatpush1.msra.mxu0 %v128
  %159 = vmatprep.subr.mxu0 0.0
  %160 = vmatpush1.msra.mxu0 %v129
  %161 = vmatprep.subr.mxu0 0.0
  %162 = vmatpush1.msra.mxu0 %v130
  %163 = vmatprep.subr.mxu0 0.0
  %164 = vmatpush1.msra.mxu0 %v131
  %165 = vmatprep.subr.mxu0 0.0
  %166 = vmatpush1.msra.mxu0 %v132
  %167 = vmatprep.subr.mxu0 0.0
  %168 = vmatpush1.msra.mxu0 %v133
  %169 = vmatprep.subr.mxu0 0.0
  %170 = vmatpush1.msra.mxu0 %v134
  %171 = vmatprep.subr.mxu0 0.0
  %172 = vmatpush1.msra.mxu0 %v135
  %173 = vmatprep.subr.mxu0 0.0
  %174 = vmatpush1.msra.mxu0 %v136
  %175 = vmatprep.subr.mxu0 0.0
  %176 = vmatpush1.msra.mxu0 %v137
  %177 = vmatprep.subr.mxu0 0.0
  %178 = vmatpush1.msra.mxu0 0.0
  %179 = vmatprep.subr.mxu0 0.0
  %180 = vmatpush1.msra.mxu0 0.0
  %181 = vmatprep.subr.mxu0 0.0
  %182 = vmatpush1.msra.mxu0 0.0
  %183 = vmatprep.subr.mxu0 0.0
  %184 = vmatpush1.msra.mxu0 0.0
  %185 = vmatprep.subr.mxu0 0.0
  %186 = vmatpush1.msra.mxu0 0.0
  %187 = vmatprep.subr.mxu0 0.0
  %188 = vmatpush1.msra.mxu0 0.0
  %189 = vmatprep.subr.mxu0 0.0
  %190 = vmatpush1.msra.mxu0 0.0
  %191 = vmatprep.subr.mxu0 0.0
  %192 = vmatpush1.msra.mxu0 0.0
  %193 = vmatprep.subr.mxu0 0.0
  %194 = vmatpush1.msra.mxu0 0.0
  %195 = vmatprep.subr.mxu0 0.0
  %196 = vmatpush1.msra.mxu0 0.0
  %197 = vmatprep.subr.mxu0 0.0
  %198 = vmatpush1.msra.mxu0 0.0
  %199 = vmatprep.subr.mxu0 0.0
  %200 = vmatpush1.msra.mxu0 0.0
  %201 = vmatprep.subr.mxu0 0.0
  %202 = vmatpush1.msra.mxu0 0.0
  %203 = vmatprep.subr.mxu0 0.0
  %204 = vmatpush1.msra.mxu0 0.0
  %205 = vmatprep.subr.mxu0 0.0
  %206 = vmatpush1.msra.mxu0 0.0
  %207 = vmatprep.subr.mxu0 0.0
  %208 = vmatpush1.msra.mxu0 0.0
  %209 = vmatprep.mubr.f32.mxu0 0.0
  %210 = vmatmul.mubr.f32.gmra.mrb[0].mxu0 %v120
  %v211 = vpop.f32.mrb[0].mxu0
  %v212 = vadd.f32 %v143, %v211
  %v213 = vpop.f32.mrb[0].mxu0
  %214 = vmatprep.mubr.f32.mxu0 0.0
  %215 = vmatmul.mubr.f32.gmra.mrb[0].mxu0 %v121
  %v216 = vpop.f32.mrb[0].mxu0
  %v217 = vadd.f32 %v143, %v216
  %v218 = vpop.f32.mrb[0].mxu0
  %219 = vdwg.mxu0
  %v220 = vadd.f32 %v212, %v20
  %v221 = vadd.f32 %v217, %v21
  %222 = vst [vmem:[%s5] sm:$0xff] %v220
  %223 = vst [vmem:[%s5 + $0x8] sm:$0xff] %v221
  // Predicated region
  $region22: #{_ffn_forward_impl.1} parent=0 // pred_check
    _
  $region23: #{_ffn_forward_impl.1} parent=0 // pred_check_branch
    %225 = sbr.rel (0) target = $region25
  $region24: #{_ffn_forward_impl.1} parent=0 // pred_region
    _
  $region25: #{_ffn_forward_impl.1} parent=0 // pred_fallthru
    _
  // Predicated region
  $region26: #{_ffn_forward_impl.1} parent=0 // pred_check
    _
  $region27: #{_ffn_forward_impl.1} parent=0 // pred_check_branch
    %227 = sbr.rel (0) target = $region29
  $region28: #{_ffn_forward_impl.1} parent=0 // pred_region
    _
  $region29: #{_ffn_forward_impl.1} parent=0 // pred_fallthru
    _

</llo_original>
